<compile_context>
chip_gen: v5e
topology: v5e:2x2
jax: 0.10.0
libtpu: 0.0.40
codegen_flags: <defaults>
</compile_context>

<pallas_src>
import jax
import jax.numpy as jnp
from jax.experimental import pallas as pl
from jax.experimental.pallas import tpu as pltpu


def _silu_kernel(x_ref, o_ref):
    xf = x_ref[...].astype(jnp.float32)
    # x * sigmoid(x): exp and the approximate reciprocal both go to the EUP
    # slot; only neg/add/mul land on the VPU.
    sig = pl.reciprocal(1.0 + jnp.exp(-xf), approx=True)
    o_ref[...] = (xf * sig).astype(o_ref.dtype)


def _min_sublane(dtype) -> int:
    itemsize = jnp.dtype(dtype).itemsize
    if itemsize >= 4:
        return 8
    if itemsize == 2:
        return 16
    return 32


_COL_CANDIDATES = (4096, 2048, 1024, 512, 256, 128)


def _choose_cols(total):
    """Largest lane-dense (multiple-of-128) column count that divides total."""
    for c in _COL_CANDIDATES:
        if total % c == 0:
            return c
    return None


def _run_2d(x2d: jax.Array, *, donate_input: bool = False) -> jax.Array:
    """Run the SiLU kernel over a 2D slab (rows, cols)."""
    rows, cols = x2d.shape
    dtype = x2d.dtype
    itemsize = jnp.dtype(dtype).itemsize
    sub = _min_sublane(dtype)

    # ~8 MiB blocks: in + out, double-buffered => 32 MiB, under the 48 MiB
    # scoped limit below and inside v7x's 64 MiB physical VMEM with headroom.
    target_block_bytes = 8 * 1024 * 1024
    max_tr = max(sub, (target_block_bytes // (cols * itemsize)) // sub * sub)

    if rows <= sub:
        # Single block along rows; block dim equals the full array dim (legal
        # even when rows isn't a multiple of the packed-sublane minimum).
        tr = rows
    else:
        # Aim for >= 4 grid steps so "parallel" can shard rows across the two
        # TensorCores on v7x (no-op on single-TC v5e/v6e).
        quarter = (rows // 4) // sub * sub
        tr = min(max_tr, max(sub, quarter))

    grid = (pl.cdiv(rows, tr),)

    total = rows * cols
    cost = pl.CostEstimate(
        flops=4 * total,              # neg, add, rcp-use, mul (rough)
        transcendentals=total,        # one exp per element
        bytes_accessed=2 * total * itemsize,
    )

    extra = {}
    if donate_input:
        # Only beneficial if the caller actually donates the buffer; otherwise
        # XLA inserts a defensive copy, so keep it opt-in.
        extra["input_output_aliases"] = {0: 0}

    return pl.pallas_call(
        _silu_kernel,
        out_shape=jax.ShapeDtypeStruct((rows, cols), dtype),
        grid_spec=pltpu.PrefetchScalarGridSpec(
            num_scalar_prefetch=0,
            grid=grid,
            in_specs=[pl.BlockSpec((tr, cols), lambda i: (i, 0))],
            out_specs=pl.BlockSpec((tr, cols), lambda i: (i, 0)),
        ),
        compiler_params=pltpu.CompilerParams(
            dimension_semantics=("parallel",),
            vmem_limit_bytes=48 * 1024 * 1024,
        ),
        cost_estimate=cost,
        **extra,
    )(x2d)


def glu(x: jax.Array, *, donate_input: bool = False) -> jax.Array:
    """Elementwise x * sigmoid(x), matching the torch GLU.forward above."""
    orig_shape = x.shape
    total = x.size
    if total == 0:
        return x

    flat = x.reshape(-1)
    cols = _choose_cols(total)

    if cols is not None:
        # Zero-copy path: cols divides total and is a multiple of 128.
        rows = total // cols
        out2d = _run_2d(flat.reshape(rows, cols), donate_input=donate_input)
        return out2d.reshape(orig_shape)

    if total < 128:
        # Tiny ragged input: single block whose dims equal the array dims.
        out2d = _run_2d(flat.reshape(1, total), donate_input=donate_input)
        return out2d.reshape(orig_shape)

    # Ragged total: kernel on the 128-aligned bulk (free reshape), plain jnp on
    # the < 128-element tail.  Avoids pad + slice (two extra full HBM passes).
    bulk = (total // 128) * 128
    cols_b = _choose_cols(bulk)
    bulk2d = flat[:bulk].reshape(bulk // cols_b, cols_b)
    out_bulk = _run_2d(bulk2d, donate_input=False).reshape(-1)

    tail = flat[bulk:]
    tail_f = tail.astype(jnp.float32)
    out_tail = (tail_f * jax.nn.sigmoid(tail_f)).astype(x.dtype)

    return jnp.concatenate([out_bulk, out_tail]).reshape(orig_shape)


if __name__ == "__main__":
    key = jax.random.PRNGKey(0)
    # Small NCHW input consistent with the module's elementwise usage.
    x = jax.random.normal(key, (2, 4, 16, 16), dtype=jnp.float32)

    out = glu(x)
    out = jax.block_until_ready(out)

    # Reference check in plain JAX.  Tolerance leaves margin for the EUP
    # approximate reciprocal used inside the kernel.
    ref = x * jax.nn.sigmoid(x)
    assert out.shape == x.shape and out.dtype == x.dtype
    assert jnp.allclose(out, ref, atol=5e-3, rtol=5e-3)

    print("KERNEL_OK")
</pallas_src>

<mosaic_0001>
module attributes {stable_mosaic.version = 11 : i64} {
  func.func @_silu_kernel(%arg0: i32, %arg1: memref<1x2048xf32, #tpu.memory_space<vmem>>, %arg2: memref<1x2048xf32, #tpu.memory_space<vmem>>) attributes {dimension_semantics = [#tpu.dimension_semantics<parallel>], iteration_bounds = array<i64: 1>, scalar_prefetch = 0 : i64, scratch_operands = 0 : i64, tpu.core_type = #tpu.core_type<tc>, window_params = [{transform_indices = @transform_0, window_bounds = array<i64: 1, 2048>}, {transform_indices = @transform_1, window_bounds = array<i64: 1, 2048>}]} {
    %c0 = arith.constant 0 : index
    %c0_0 = arith.constant 0 : index
    %0 = vector.load %arg1[%c0, %c0_0] : memref<1x2048xf32, #tpu.memory_space<vmem>>, vector<1x2048xf32>
    %cst = arith.constant 0.000000e+00 : f32
    %1 = vector.broadcast %cst : f32 to vector<1x2048xf32>
    %2 = arith.subf %1, %0 : vector<1x2048xf32>
    %3 = math.exp %2 : vector<1x2048xf32>
    %cst_1 = arith.constant 1.000000e+00 : f32
    %4 = vector.broadcast %cst_1 : f32 to vector<1x2048xf32>
    %5 = arith.addf %4, %3 : vector<1x2048xf32>
    %6 = tpu.reciprocal %5 {approx = true} : vector<1x2048xf32> -> vector<1x2048xf32>
    %7 = arith.mulf %0, %6 : vector<1x2048xf32>
    %c0_2 = arith.constant 0 : index
    %c0_3 = arith.constant 0 : index
    %8 = vector.load %arg2[%c0_2, %c0_3] : memref<1x2048xf32, #tpu.memory_space<vmem>>, vector<1x2048xf32>
    tpu.vector_store %arg2[%c0_2, %c0_3], %7 {strides = array<i32>} : memref<1x2048xf32, #tpu.memory_space<vmem>>, vector<1x2048xf32>,
    return
  }
  func.func @transform_0(%arg0: i32) -> (i32, i32) {
    %c0_i32 = arith.constant 0 : i32
    %c0_i32_0 = arith.constant 0 : i32
    return %arg0, %c0_i32 : i32, i32
  }
  func.func @transform_1(%arg0: i32) -> (i32, i32) {
    %c0_i32 = arith.constant 0 : i32
    %c0_i32_0 = arith.constant 0 : i32
    return %arg0, %c0_i32 : i32, i32
  }
}

</mosaic_0001>

<llo_original>
// kernel: tpu_custom_call.1
$region0: #{tpu_custom_call.1}
  #allocation0 [shape = 'u32[]', space=smem, size = 0x4, offset = 0x4, fixed_abs, tag = 'smem constant byte address 0x4 - core index']
  #allocation1 [shape = 'u32[72,128]{1,0:T(1,128)}', space=vmem, size = 0x9000, scoped, tag = 'internal scratch']
  %s0 = inlined_call_operand.hbm [shape: f32[1,2048], index: 0, kind: input, shape index: {}]
  %s1 = inlined_call_operand.hbm [shape: f32[1,2048], index: 1, kind: output, shape index: {}]
  %s2 = sld [smem:[#allocation0]]
  $region18: #{tpu_custom_call.1} parent=0
    _
  %s4 = ssub.s32 1, %s2
  %s5 = scalar_select 0, %s4, %s2
  $region1: #{tpu_custom_call.1} parent=0
    #allocation2 [shape = 'u8[8192]{0}', space=vmem, size = 0x2000, scoped, tag = 'input window, operand 0, single buffered']
    #allocation3 [shape = 's32[1]{0}', space=sflag, size = 0x4, scoped, tag = 'scoped memory for tpu_custom_call.1']
    #allocation4 [shape = 's32[1]{0}', space=sflag, size = 0x4, scoped, tag = 'scoped memory for tpu_custom_call.1']
    #allocation5 [shape = 'u8[8192]{0}', space=vmem, size = 0x2000, scoped, tag = 'output window, operand 0, single buffered']
    %6 = vsyncpa [#allocation3], 0
    %7 = vsyncpa [#allocation4], 0
    // Predicated region
    $region2: #{tpu_custom_call.1} parent=1 // pred_check
      _
    $region3: #{tpu_custom_call.1} parent=1 // pred_check_branch
      %9 = sbr.rel (0) target = $region5
    $region4: #{tpu_custom_call.1} parent=1 // pred_region
      %11 = vsyncadd [#allocation3], 0
      %s13 = sshll.u32 %s0, 4
      %s14 = int_to_ptr.hbm [resolvable:$true] %s13
      %s15 = sshll.u32 [#allocation2], 4
      %s16 = int_to_ptr.vmem [resolvable:$true] %s15
      %18 = dma.hbm_to_vmem [thread:$0]  %s14, 256, %s16, [#allocation3]
    $region5: #{tpu_custom_call.1} parent=1 // pred_fallthru
      _
    // Predicated region
    $region6: #{tpu_custom_call.1} parent=1 // pred_check
      _
    $region7: #{tpu_custom_call.1} parent=1 // pred_check_branch
      %20 = sbr.rel (0) target = $region9
    $region8: #{tpu_custom_call.1} parent=1 // pred_region
      %22 = dma.done [#allocation3], 256
    $region9: #{tpu_custom_call.1} parent=1 // pred_fallthru
      _
    %v23 = vld [vmem:[#allocation2] sm:$0xff]
    %v24 = vld [vmem:[#allocation2 + $0x8] sm:$0xff]
    %v25 = vsub.f32 0.0, %v23
    %v26 = vsub.f32 0.0, %v24
    %v27 = vmul.f32 %v25, 1.442695
    %v28 = vpow.pop %v27
    %v29 = vmul.f32 %v26, 1.442695
    %v30 = vpow.pop %v29
    %v31 = vadd.f32 %v28, 1.0
    %v32 = vadd.f32 %v30, 1.0
    %v33 = vrcp.pop %v31
    %v34 = vrcp.pop %v32
    %v35 = vmul.f32 %v23, %v33
    %v36 = vmul.f32 %v24, %v34
    %37 = vst [vmem:[#allocation5] sm:$0xff] %v35
    %38 = vst [vmem:[#allocation5 + $0x8] sm:$0xff] %v36
    // Predicated region
    $region10: #{tpu_custom_call.1} parent=1 // pred_check
      _
    $region11: #{tpu_custom_call.1} parent=1 // pred_check_branch
      %40 = sbr.rel (0) target = $region13
    $region12: #{tpu_custom_call.1} parent=1 // pred_region
      %42 = vsyncadd [#allocation4], 0
      %s44 = sshll.u32 [#allocation5], 4
      %s45 = int_to_ptr.vmem [resolvable:$true] %s44
      %s46 = sshll.u32 %s1, 4
      %s47 = int_to_ptr.hbm [resolvable:$true] %s46
      %49 = dma.vmem_to_hbm [thread:$0]  %s45, 256, %s47, [#allocation4]
    $region13: #{tpu_custom_call.1} parent=1 // pred_fallthru
      _
    // Predicated region
    $region14: #{tpu_custom_call.1} parent=1 // pred_check
      _
    $region15: #{tpu_custom_call.1} parent=1 // pred_check_branch
      %51 = sbr.rel (0) target = $region17
    $region16: #{tpu_custom_call.1} parent=1 // pred_region
      %53 = dma.done [#allocation4], 256
    $region17: #{tpu_custom_call.1} parent=1 // pred_fallthru
      _
    %54 = vsyncpa [#allocation3], 1
    %55 = vsyncpa [#allocation4], 1

</llo_original>
